<compile_context>
chip_gen: v6e
topology: v6e:2x2x1
jax: 0.10.0
libtpu: 0.0.40
codegen_flags: <defaults>
</compile_context>

<pallas_src>
import jax
import jax.numpy as jnp
from jax.experimental import pallas as pl
from jax.experimental.pallas import tpu as pltpu


def _relu6_kernel(x_ref, o_ref):
    # Elementwise clamp(x, 0, 6); purely HBM-bandwidth bound.
    # Python-int bounds are weakly typed -> dtype (f32/bf16/int) is preserved.
    o_ref[...] = jnp.clip(x_ref[...], 0, 6).astype(o_ref.dtype)


def _block_policy():
    """Pick (block_bytes, vmem_limit_bytes) per TPU generation."""
    block_bytes = 4 << 20          # ~4 MiB: >=86% HBM roofline on v5e/v6e
    try:
        info = pltpu.get_tpu_info()
        vmem_cap = getattr(info, "vmem_capacity_bytes", 128 << 20)
        if vmem_cap <= (64 << 20):  # v7x: 64 MiB VMEM/TC, ~3.2 TB/s HBM
            block_bytes = 6 << 20   # bigger blocks hide the ~0.35us step cost
    except Exception:
        pass
    # 48 MiB scoped VMEM: room for 4x block (in+out double-buffered) plus
    # internal scratch, and still under v7x's 64 MiB physical per-TC VMEM.
    return block_bytes, 48 << 20


def _relu6_2d(x2d, row_tile, vmem_limit):
    """Run the relu6 kernel over a lane-dense 2-D slab."""
    rows, lanes = x2d.shape
    grid = (pl.cdiv(rows, row_tile),)
    return pl.pallas_call(
        _relu6_kernel,
        out_shape=jax.ShapeDtypeStruct((rows, lanes), x2d.dtype),
        grid=grid,
        in_specs=[pl.BlockSpec((row_tile, lanes), lambda i: (i, 0))],
        out_specs=pl.BlockSpec((row_tile, lanes), lambda i: (i, 0)),
        # Relu6 is safe in place; aliasing avoids a second full-size HBM
        # allocation whenever the caller donates the activation buffer.
        input_output_aliases={0: 0},
        compiler_params=pltpu.CompilerParams(
            dimension_semantics=("parallel",),
            vmem_limit_bytes=vmem_limit),
    )(x2d)


def _run_lane_dense(x2d, packing, block_bytes, vmem_limit):
    rows, lanes = x2d.shape
    itemsize = jnp.dtype(x2d.dtype).itemsize
    target_rows = max(packing,
                      (block_bytes // (lanes * itemsize)) // packing * packing)

    if rows < 2 * packing:
        # Tiny input: single full-extent block (splitting would force a
        # sub-(8,128) block shape and buys nothing at this size).
        row_tile = rows
    else:
        # Force an even number of >=2 tiles so both v7x TensorCores get work
        # and the megacore split is balanced; v5e/v6e (1 TC) are unaffected.
        ntiles = pl.cdiv(rows, target_rows)
        if ntiles == 1:
            ntiles = 2
        elif ntiles % 2:
            ntiles += 1
        row_tile = pl.cdiv(pl.cdiv(rows, ntiles), packing) * packing
        row_tile = max(row_tile, packing)

    return _relu6_2d(x2d, row_tile, vmem_limit)


def q_relu6(x, *, act_func=True):
    """Forward of Q_ReLU6 with default settings (num_bit=32 -> no quant)."""
    if not act_func:
        return x  # identity path (act_func=False, num_bit=32)

    orig_shape = x.shape
    n = x.size
    itemsize = jnp.dtype(x.dtype).itemsize
    # sublane packing factor: 8 rows/vreg for 32-bit, 16 for bf16, 32 for int8
    packing = {4: 8, 2: 16, 1: 32}.get(itemsize, 8)
    block_bytes, vmem_limit = _block_policy()

    # Widest lane-dense last dim that divides the element count (conv
    # activations essentially always divide 128 -> no copies on this path).
    lanes = None
    for cand in (1024, 512, 256, 128):
        if n % cand == 0:
            lanes = cand
            break

    if lanes is not None:
        x2d = x.reshape(n // lanes, lanes)
        return _run_lane_dense(x2d, packing, block_bytes, vmem_limit).reshape(orig_shape)

    # Rare fallback: n not divisible by 128. Run the kernel on the 128-aligned
    # bulk and clamp the <128-element tail with plain jnp.clip, then stitch.
    # (No full-array pad/concat/slice copies on the hot data.)
    lanes = 128
    m = (n // lanes) * lanes
    flat = x.reshape(-1)
    if m == 0:
        return jnp.clip(flat, 0, 6).astype(x.dtype).reshape(orig_shape)
    bulk2d = flat[:m].reshape(m // lanes, lanes)
    bulk_out = _run_lane_dense(bulk2d, packing, block_bytes, vmem_limit).reshape(-1)
    tail_out = jnp.clip(flat[m:], 0, 6).astype(x.dtype)
    return jnp.concatenate([bulk_out, tail_out]).reshape(orig_shape)


if __name__ == "__main__":
    key = jax.random.PRNGKey(0)
    relu6 = jax.jit(q_relu6)

    # Small NCHW input, like a PyTorch conv activation.
    x = jax.random.normal(key, (2, 4, 16, 16), dtype=jnp.float32) * 5.0
    y = jax.block_until_ready(relu6(x))
    ref = jnp.clip(x, 0.0, 6.0)
    assert y.shape == x.shape and y.dtype == x.dtype
    assert jnp.max(jnp.abs(y - ref)) == 0.0

    # Larger input to exercise the multi-step (even, >=2) "parallel" grid.
    x2 = jax.random.normal(key, (4, 32, 64, 64), dtype=jnp.float32) * 5.0
    y2 = jax.block_until_ready(relu6(x2))
    ref2 = jnp.clip(x2, 0.0, 6.0)
    assert y2.shape == x2.shape and y2.dtype == x2.dtype
    assert jnp.max(jnp.abs(y2 - ref2)) == 0.0

    # Odd element count (not a multiple of 128): bulk kernel + jnp.clip tail.
    x3 = jax.random.normal(key, (3, 43), dtype=jnp.float32) * 5.0
    y3 = jax.block_until_ready(relu6(x3))
    ref3 = jnp.clip(x3, 0.0, 6.0)
    assert y3.shape == x3.shape and y3.dtype == x3.dtype
    assert jnp.max(jnp.abs(y3 - ref3)) == 0.0

    print("KERNEL_OK")
</pallas_src>

<mosaic_0001>
module attributes {stable_mosaic.version = 11 : i64} {
  func.func @_relu6_kernel(%arg0: i32, %arg1: memref<2x1024xf32, #tpu.memory_space<vmem>>, %arg2: memref<2x1024xf32, #tpu.memory_space<vmem>>) attributes {dimension_semantics = [#tpu.dimension_semantics<parallel>], iteration_bounds = array<i64: 1>, scalar_prefetch = 0 : i64, scratch_operands = 0 : i64, tpu.core_type = #tpu.core_type<tc>, window_params = [{transform_indices = @transform_0, window_bounds = array<i64: 2, 1024>}, {transform_indices = @transform_1, window_bounds = array<i64: 2, 1024>}]} {
    %c0 = arith.constant 0 : index
    %c0_0 = arith.constant 0 : index
    %0 = vector.load %arg1[%c0, %c0_0] : memref<2x1024xf32, #tpu.memory_space<vmem>>, vector<2x1024xf32>
    %c0_i32 = arith.constant 0 : i32
    %c6_i32 = arith.constant 6 : i32
    %1 = arith.sitofp %c0_i32 : i32 to f32
    %2 = vector.broadcast %1 : f32 to vector<2x1024xf32>
    %3 = arith.maximumf %2, %0 : vector<2x1024xf32>
    %4 = arith.sitofp %c6_i32 : i32 to f32
    %5 = vector.broadcast %4 : f32 to vector<2x1024xf32>
    %6 = arith.minimumf %5, %3 : vector<2x1024xf32>
    %c0_1 = arith.constant 0 : index
    %c0_2 = arith.constant 0 : index
    %7 = vector.load %arg2[%c0_1, %c0_2] : memref<2x1024xf32, #tpu.memory_space<vmem>>, vector<2x1024xf32>
    tpu.vector_store %arg2[%c0_1, %c0_2], %6 {strides = array<i32>} : memref<2x1024xf32, #tpu.memory_space<vmem>>, vector<2x1024xf32>,
    return
  }
  func.func @transform_0(%arg0: i32) -> (i32, i32) {
    %c0_i32 = arith.constant 0 : i32
    %c0_i32_0 = arith.constant 0 : i32
    return %arg0, %c0_i32 : i32, i32
  }
  func.func @transform_1(%arg0: i32) -> (i32, i32) {
    %c0_i32 = arith.constant 0 : i32
    %c0_i32_0 = arith.constant 0 : i32
    return %arg0, %c0_i32 : i32, i32
  }
}

</mosaic_0001>

<llo_original>
// kernel: q_relu6.1
$region0: #{q_relu6.1}
  #allocation0 [shape = 'u32[]', space=smem, size = 0x4, offset = 0x4, fixed_abs, tag = 'smem constant byte address 0x4 - core index']
  #allocation1 [shape = 'u32[144,128]{1,0:T(1,128)}', space=vmem, size = 0x12000, scoped, tag = 'internal scratch']
  %s0 = inlined_call_operand.vmem [shape: f32[2,1024], index: 0, kind: input, shape index: {}, may-alias: {0,1}]
  %s1 = inlined_call_operand.vmem [shape: f32[2,1024], index: 1, kind: output, shape index: {}, may-alias: {0,1}]
  %s2 = sld [smem:[#allocation0]]
  $region14: #{q_relu6.1} parent=0
    _
  %s4 = ssub.s32 1, %s2
  %s5 = scalar_select 0, %s4, %s2
  // Predicated region
  $region2: #{q_relu6.1} parent=0 // pred_check
    _
  $region3: #{q_relu6.1} parent=0 // pred_check_branch
    %7 = sbr.rel (0) target = $region5
  $region4: #{q_relu6.1} parent=0 // pred_region
    _
  $region5: #{q_relu6.1} parent=0 // pred_fallthru
    _
  %v8 = vld [vmem:[%s0] sm:$0xff]
  %v9 = vld [vmem:[%s0 + $0x8] sm:$0xff]
  %v10 = vmax.f32 %v8, 0.0
  %v11 = vmax.f32 %v9, 0.0
  %v12 = vmin.f32 %v10, 6.0
  %v13 = vmin.f32 %v11, 6.0
  %14 = vst [vmem:[%s1] sm:$0xff] %v12
  %15 = vst [vmem:[%s1 + $0x8] sm:$0xff] %v13
  // Predicated region
  $region6: #{q_relu6.1} parent=0 // pred_check
    _
  $region7: #{q_relu6.1} parent=0 // pred_check_branch
    %17 = sbr.rel (0) target = $region9
  $region8: #{q_relu6.1} parent=0 // pred_region
    _
  $region9: #{q_relu6.1} parent=0 // pred_fallthru
    _
  // Predicated region
  $region10: #{q_relu6.1} parent=0 // pred_check
    _
  $region11: #{q_relu6.1} parent=0 // pred_check_branch
    %19 = sbr.rel (0) target = $region13
  $region12: #{q_relu6.1} parent=0 // pred_region
    _
  $region13: #{q_relu6.1} parent=0 // pred_fallthru
    _

</llo_original>
